<compile_context>
chip_gen: v5e
topology: v5e:2x2
jax: 0.10.0
libtpu: 0.0.40
codegen_flags: <defaults>
</compile_context>

<pallas_src>
import jax
import jax.numpy as jnp
import numpy as np
from jax.experimental import pallas as pl
from jax.experimental.pallas import tpu as pltpu

EPS = 1e-4
NEG = -1e30                      # finite "-inf" sentinel (avoids inf-inf NaNs)
COMPUTE_DTYPE = jnp.bfloat16     # MXU compute dtype; accumulation stays f32


def _round_up(x, m):
    return ((x + m - 1) // m) * m


def _flatten_pairs(pairs):
    out = []
    for w, b in pairs:
        out += [w, b]
    return out


def _const_spec(shape):
    """Full-array block with a constant index_map: stays VMEM-resident across the grid."""
    nd = len(shape)
    return pl.BlockSpec(tuple(shape), lambda i, _n=nd: (0,) * _n)


_VMEM_SPEC = pl.BlockSpec(memory_space=pltpu.MemorySpace.VMEM)


def _lin_t(w_ref, b_ref, x):
    """y.T = W @ x.T + b ;  x: [in, cols] (bf16/f32), W: [out, in] bf16, b: [out, 1] f32."""
    w = w_ref[...]
    return jnp.dot(w, x.astype(w.dtype), preferred_element_type=jnp.float32) + b_ref[...]


# --------------------- kernel 1: graph-level (Q encoder + critic) ---------------------
def make_graph_kernel(n_q_layers, n_c_layers):
    def kernel(*refs):
        it = iter(refs)
        g_ref = next(it)                                          # [D_in, B_pad] f32
        q_layers = [(next(it), next(it)) for _ in range(n_q_layers)]
        qf_w, qf_b = next(it), next(it)
        c_layers = [(next(it), next(it)) for _ in range(n_c_layers)]
        cf_w, cf_b = next(it), next(it)
        qf_out = next(it)                                         # [d_k, B_pad] bf16
        val_out = next(it)                                        # [1,  B_pad] f32

        gT = g_ref[...]
        X = gT
        for w, b in q_layers:
            # bf16 activations: fuse the cast into the ReLU (halves live vreg bytes).
            X = jnp.maximum(_lin_t(w, b, X), 0.0).astype(COMPUTE_DTYPE)
        qf_out[...] = _lin_t(qf_w, qf_b, X).astype(qf_out.dtype)  # Q_final_layer (no relu)

        Y = gT
        for w, b in c_layers:
            Y = jnp.maximum(_lin_t(w, b, Y), 0.0).astype(COMPUTE_DTYPE)
        val_out[...] = _lin_t(cf_w, cf_b, Y)                      # critic final_layer
    return kernel


# -------------- shared body: K encoder + attention logits for one candidate tile -------
def _attention_logits(bidx_row, cand_x, qf_ref, k_layers, kf_w, kf_b,
                      f1a_w, f1b_w, f1_b, f2_w, f2_b, b_pad, tile_n):
    """Returns (member [B_pad, T] bool, logits [1, T] f32)."""
    # candidate -> graph one-hot membership, built in-kernel (no [N,B] DMA).
    # TODO(synk): for hundreds of graphs, switch to a per-tile graph-offset window via
    # PrefetchScalarGridSpec so the membership cost is O(graphs-in-tile), not O(B).
    iota_b = jax.lax.broadcasted_iota(jnp.int32, (b_pad, tile_n), 0)
    member = (bidx_row == iota_b)                                 # (B_pad, T) bool
    onehot = member.astype(COMPUTE_DTYPE)                         # bf16 gather operand

    # K encoder chain (bf16 operands + bf16 activations, f32 MXU accumulation).
    X = cand_x
    for w, b in k_layers:
        X = jnp.maximum(_lin_t(w, b, X), 0.0).astype(COMPUTE_DTYPE)
    Kf = _lin_t(kf_w, kf_b, X)                                    # (d_k, T) f32

    # batched_expand: exact gather of the (bf16) graph embedding via one-hot matmul.
    Qexp = jnp.dot(qf_ref[...], onehot, preferred_element_type=jnp.float32)

    # final_layers[0] on concat([Q, K]) -> split-weight form (no in-kernel lane concat).
    A = jnp.maximum(Qexp, 0.0).astype(f1a_w.dtype)
    Bc = jnp.maximum(Kf, 0.0).astype(f1b_w.dtype)
    X1 = (jnp.dot(f1a_w[...], A, preferred_element_type=jnp.float32)
          + jnp.dot(f1b_w[...], Bc, preferred_element_type=jnp.float32)
          + f1_b[...])                                            # (d_k, T)
    logits = (jnp.dot(f2_w[...],
                      jnp.maximum(X1, 0.0).astype(f2_w.dtype),
                      preferred_element_type=jnp.float32)
              + f2_b[...])                                        # (1, T) lane-dense
    return member, logits


# ----------- kernel 2a (multi-tile): logits + packed partial softmax stats -------------
def make_cand_kernel(n_k_layers, b_pad, tile_n):
    def kernel(*refs):
        it = iter(refs)
        bidx_ref = next(it)                                       # (1, 1, TILE_N) int32
        cand_ref = next(it)                                       # (D_in_k, TILE_N) bf16
        qf_ref = next(it)                                         # (d_k, B_pad)   bf16
        k_layers = [(next(it), next(it)) for _ in range(n_k_layers)]
        kf_w, kf_b = next(it), next(it)
        f1a_w, f1b_w, f1_b = next(it), next(it), next(it)
        f2_w, f2_b = next(it), next(it)
        logits_ref = next(it)                                     # (1, 1, TILE_N)
        stats_ref = next(it)                                      # (1, 2*B_pad, 1): [max; sum]

        member, logits = _attention_logits(bidx_ref[0], cand_ref[...], qf_ref, k_layers,
                                           kf_w, kf_b, f1a_w, f1b_w, f1_b, f2_w, f2_b,
                                           b_pad, tile_n)
        logits_ref[0] = logits

        # per-tile, per-graph partial softmax stats (f32 epilogue), packed in ONE output.
        masked = jnp.where(member, logits, NEG)                   # (B_pad, T)
        gmax = jnp.max(masked, axis=1, keepdims=True)             # (B_pad, 1)
        node_max = jnp.sum(jnp.where(member, gmax, 0.0), axis=0, keepdims=True)  # (1, T)
        e = jnp.exp(logits - node_max)                            # (1, T)
        gsum = jnp.sum(jnp.where(member, e, 0.0), axis=1, keepdims=True)          # (B_pad, 1)
        stats_ref[0] = jnp.concatenate([gmax, gsum], axis=0)      # (2*B_pad, 1)
    return kernel


# --------- kernel 2b (single-tile fast path): logits + full softmax, probs out ---------
def make_cand_softmax_kernel(n_k_layers, b_pad, tile_n):
    def kernel(*refs):
        it = iter(refs)
        bidx_ref = next(it)                                       # (1, TILE_N) int32
        cand_ref = next(it)                                       # (D_in_k, TILE_N) bf16
        qf_ref = next(it)                                         # (d_k, B_pad)   bf16
        k_layers = [(next(it), next(it)) for _ in range(n_k_layers)]
        kf_w, kf_b = next(it), next(it)
        f1a_w, f1b_w, f1_b = next(it), next(it), next(it)
        f2_w, f2_b = next(it), next(it)
        probs_ref = next(it)                                      # (1, TILE_N) f32

        member, logits = _attention_logits(bidx_ref[...], cand_ref[...], qf_ref, k_layers,
                                           kf_w, kf_b, f1a_w, f1b_w, f1_b, f2_w, f2_b,
                                           b_pad, tile_n)
        masked = jnp.where(member, logits, NEG)
        gmax = jnp.max(masked, axis=1, keepdims=True)             # (B_pad, 1)
        node_max = jnp.sum(jnp.where(member, gmax, 0.0), axis=0, keepdims=True)
        e = jnp.exp(logits - node_max)                            # (1, T)
        gsum = jnp.sum(jnp.where(member, e, 0.0), axis=1, keepdims=True) + EPS    # add_pool + EPS
        node_sum = jnp.sum(jnp.where(member, gsum, 0.0), axis=0, keepdims=True)   # (1, T)
        node_sum = jnp.where(node_sum > 0.0, node_sum, 1.0)       # guard padded lanes
        probs_ref[...] = e * pl.reciprocal(node_sum, approx=False)
    return kernel


# ----------------- kernel 3: lane-dense softmax normalization epilogue -----------------
def make_norm_kernel(b_pad, tile_n):
    def kernel(bidx_ref, logits_ref, m_ref, l_ref, probs_ref):
        bidx = bidx_ref[0]                                        # (1, TILE_N)
        iota_b = jax.lax.broadcasted_iota(jnp.int32, (b_pad, tile_n), 0)
        member = (bidx == iota_b)                                 # (B_pad, TILE_N)
        node_m = jnp.sum(jnp.where(member, m_ref[...], 0.0), axis=0, keepdims=True)
        node_l = jnp.sum(jnp.where(member, l_ref[...], 0.0), axis=0, keepdims=True)
        node_l = jnp.where(node_l > 0.0, node_l, 1.0)             # guard padded lanes
        e = jnp.exp(logits_ref[0] - node_m)
        probs_ref[0] = e * pl.reciprocal(node_l, approx=False)
    return kernel


# ------------------------------------ wrapper -------------------------------------------
def gapn_forward(g, cand, batch_idx, actor_params, critic_params, *, tile_n_max=1024):
    """Returns (probs [N] of GAPN_Actor, values [B] of GAPN_Critic).

    tile_n_max: 1024 is a good default on v6e/v7x; ~512 on v5e.
    """
    B, d_in = g.shape
    N = cand.shape[0]
    d_k = actor_params["q_final"][0].shape[0]

    b_pad = _round_up(max(B, 1), 8)
    d_in_k = _round_up(d_in, 16)            # bf16 (16,128) tile rule for the candidate block

    # tile size: single 128-lane tile when it fits; otherwise >= 2 tiles so v7x's second
    # TensorCore gets work (negligible extra step cost on 1-TC chips).
    n128 = _round_up(max(N, 1), 128)
    if n128 <= 128:
        tile_n = 128
    else:
        tile_n = max(128, min(tile_n_max, _round_up(n128 // 2, 128)))
    n_pad = _round_up(n128, tile_n)
    num_tiles = n_pad // tile_n

    # feature-major layout: features on sublanes, graphs/candidates on lanes.
    gT = jnp.zeros((d_in, b_pad), jnp.float32).at[:, :B].set(g.T.astype(jnp.float32))
    # candidate stream in bf16 (halves the dominant HBM read; kernel casts to bf16 anyway).
    candT = (jnp.zeros((d_in_k, n_pad), COMPUTE_DTYPE)
             .at[:d_in, :N].set(cand.T.astype(COMPUTE_DTYPE)))
    bidx = jnp.full((n_pad,), -1, jnp.int32).at[:N].set(batch_idx.astype(jnp.int32))

    q_flat = _flatten_pairs(actor_params["q_layers"]) + list(actor_params["q_final"])
    c_flat = _flatten_pairs(critic_params["layers"]) + list(critic_params["final"])

    # pad the first K-chain weight's input axis to match the padded candidate feature dim.
    k_pairs = list(actor_params["k_layers"])
    kfin_w, kfin_b = actor_params["k_final"]
    if d_in_k != d_in:
        if k_pairs:
            w0, b0 = k_pairs[0]
            k_pairs[0] = (jnp.pad(w0, ((0, 0), (0, d_in_k - d_in))), b0)
        else:
            kfin_w = jnp.pad(kfin_w, ((0, 0), (0, d_in_k - d_in)))
    k_flat = (_flatten_pairs(k_pairs) + [kfin_w, kfin_b]
              + list(actor_params["f1"]) + list(actor_params["f2"]))

    # ---- kernel 1: tiny graph-level launch (Q encoder + critic fused), Q emitted bf16 ----
    qfT, valT = pl.pallas_call(
        make_graph_kernel(len(actor_params["q_layers"]), len(critic_params["layers"])),
        out_shape=(jax.ShapeDtypeStruct((d_k, b_pad), COMPUTE_DTYPE),
                   jax.ShapeDtypeStruct((1, b_pad), jnp.float32)),
        in_specs=[_VMEM_SPEC] * (1 + len(q_flat) + len(c_flat)),
        out_specs=(_VMEM_SPEC, _VMEM_SPEC),
    )(gT, *q_flat, *c_flat)
    values = valT[0, :B]

    cand_const = [qfT] + k_flat
    n_k = len(actor_params["k_layers"])

    if num_tiles == 1:
        # ---- single-tile fast path: finish the per-graph softmax in-kernel ----
        probs_row = pl.pallas_call(
            make_cand_softmax_kernel(n_k, b_pad, tile_n),
            out_shape=jax.ShapeDtypeStruct((1, tile_n), jnp.float32),
            in_specs=[_VMEM_SPEC] * (2 + len(cand_const)),
            out_specs=_VMEM_SPEC,
        )(bidx.reshape(1, tile_n), candT, *cand_const)
        return probs_row[0, :N], values

    # ---- kernel 2: candidate tiles (parallel grid, pipelined DMA) ----
    bidx3 = bidx.reshape(num_tiles, 1, tile_n)
    in_specs = [pl.BlockSpec((1, 1, tile_n), lambda i: (i, 0, 0)),     # batch-idx tile
                pl.BlockSpec((d_in_k, tile_n), lambda i: (0, i))]      # candidate tile (bf16)
    in_specs += [_const_spec(tuple(a.shape)) for a in cand_const]      # VMEM-resident consts
    logits3, stats3 = pl.pallas_call(
        make_cand_kernel(n_k, b_pad, tile_n),
        grid=(num_tiles,),
        out_shape=(jax.ShapeDtypeStruct((num_tiles, 1, tile_n), jnp.float32),
                   jax.ShapeDtypeStruct((num_tiles, 2 * b_pad, 1), jnp.float32)),
        in_specs=in_specs,
        out_specs=(pl.BlockSpec((1, 1, tile_n), lambda i: (i, 0, 0)),
                   pl.BlockSpec((1, 2 * b_pad, 1), lambda i: (i, 0, 0))),
        compiler_params=pltpu.CompilerParams(
            dimension_semantics=("parallel",),
            vmem_limit_bytes=32 * 1024 * 1024),
    )(bidx3, candT, *cand_const)

    # combine per-tile partial (max, sum-exp) into per-graph softmax stats (tiny XLA op).
    m_part = stats3[:, :b_pad, 0]                              # [num_tiles, B_pad]
    l_part = stats3[:, b_pad:, 0]
    m = jnp.max(m_part, axis=0)                                # per-graph max
    # exp(NEG - m) underflows to exactly 0 for tiles with no candidates of a graph.
    l = jnp.sum(l_part * jnp.exp(m_part - m[None, :]), axis=0) + EPS   # add_pool + EPS

    # ---- kernel 3: probs = exp(logit - m[g]) / l[g], lane-dense ----
    probs3 = pl.pallas_call(
        make_norm_kernel(b_pad, tile_n),
        grid=(num_tiles,),
        out_shape=jax.ShapeDtypeStruct((num_tiles, 1, tile_n), jnp.float32),
        in_specs=[pl.BlockSpec((1, 1, tile_n), lambda i: (i, 0, 0)),
                  pl.BlockSpec((1, 1, tile_n), lambda i: (i, 0, 0)),
                  _const_spec((b_pad, 1)),
                  _const_spec((b_pad, 1))],
        out_specs=pl.BlockSpec((1, 1, tile_n), lambda i: (i, 0, 0)),
        compiler_params=pltpu.CompilerParams(
            dimension_semantics=("parallel",),
            vmem_limit_bytes=32 * 1024 * 1024),
    )(bidx3, logits3, m.reshape(b_pad, 1), l.reshape(b_pad, 1))

    probs = probs3.reshape(n_pad)[:N]
    return probs, values


def select_action(key, g, cand, batch_idx, actor_params, critic_params, *, tile_n_max=1024):
    """Mirrors GAPN_Actor.forward + GAPN_Critic.get_value.

    Assumes batch_idx is sorted / contiguous (standard PyG batching), as the reference
    get_batch_shift does. Returns (probs, action_logprobs, actions, values).
    """
    probs, values = gapn_forward(g, cand, batch_idx, actor_params, critic_params,
                                 tile_n_max=tile_n_max)
    B = g.shape[0]
    mask = (batch_idx[None, :] == jnp.arange(B)[:, None]).astype(jnp.float32)   # [B, N]
    p = probs[None, :] * mask
    p_thr = p * (p > EPS)
    # Guard: if thresholding removed every candidate of a graph, fall back to unthresholded
    # masked probs (torch Categorical would error on an all-zero row).
    has_mass = jnp.sum(p_thr, axis=1, keepdims=True) > 0.0
    p_use = jnp.where(has_mass, p_thr, p)
    logits = jnp.where(p_use > 0, jnp.log(p_use), -jnp.inf)
    shifted_actions = jax.random.categorical(key, logits, axis=-1)              # [B]
    counts = jnp.sum(mask, axis=1).astype(jnp.int32)
    shift = jnp.concatenate([jnp.zeros((1,), jnp.int32), jnp.cumsum(counts)[:-1]])
    actions = shifted_actions - shift
    action_logprobs = jnp.log(probs[shifted_actions])
    return probs, action_logprobs, actions, values


# --------------------------- deterministic parameter init -------------------------------
def _init_linear(key, in_dim, out_dim, w_dtype=COMPUTE_DTYPE):
    """torch.nn.Linear default init; weight stored [out, in] (bf16), bias [out, 1] (f32)."""
    kw, kb = jax.random.split(key)
    bound = 1.0 / np.sqrt(in_dim)
    w = jax.random.uniform(kw, (out_dim, in_dim), jnp.float32, -bound, bound).astype(w_dtype)
    b = jax.random.uniform(kb, (out_dim, 1), jnp.float32, -bound, bound)
    return w, b


def build_actor_params(key, input_dim, enc_nb_layers, enc_nb_hidden, enc_nb_output):
    p = {"q_layers": [], "k_layers": []}
    d = input_dim
    for _ in range(enc_nb_layers):
        key, k1, k2 = jax.random.split(key, 3)
        p["q_layers"].append(_init_linear(k1, d, enc_nb_hidden))
        p["k_layers"].append(_init_linear(k2, d, enc_nb_hidden))
        d = enc_nb_hidden
    key, k1, k2 = jax.random.split(key, 3)
    p["q_final"] = _init_linear(k1, d, enc_nb_output)
    p["k_final"] = _init_linear(k2, d, enc_nb_output)
    key, k1, k2 = jax.random.split(key, 3)
    w1, b1 = _init_linear(k1, 2 * enc_nb_output, enc_nb_output)
    # split final_layers[0] weight along the concat axis: [:, :d_k] acts on Q, [:, d_k:] on K
    p["f1"] = (w1[:, :enc_nb_output], w1[:, enc_nb_output:], b1)
    p["f2"] = _init_linear(k2, enc_nb_output, 1)
    return p


def build_critic_params(key, input_dim, enc_nb_layers, enc_nb_hidden):
    p = {"layers": []}
    d = input_dim
    for _ in range(enc_nb_layers):
        key, k = jax.random.split(key)
        p["layers"].append(_init_linear(k, d, enc_nb_hidden))
        d = enc_nb_hidden
    key, k = jax.random.split(key)
    p["final"] = _init_linear(k, d, 1)
    return p


# ------------------------------ pure-JAX references -------------------------------------
def _lin_ref(x, w, b):
    # mirrors the kernel math: bf16 operands, f32 accumulation, f32 bias add.
    return jnp.dot(x.astype(w.dtype), jnp.transpose(w),
                   preferred_element_type=jnp.float32) + jnp.transpose(b)


def actor_probs_ref(g, cand, batch_idx, ap):
    Q, K = g, cand
    for (wq, bq), (wk, bk) in zip(ap["q_layers"], ap["k_layers"]):
        Q = jnp.maximum(_lin_ref(Q, wq, bq), 0.0)
        K = jnp.maximum(_lin_ref(K, wk, bk), 0.0)
    Q = _lin_ref(Q, *ap["q_final"])
    K = _lin_ref(K, *ap["k_final"])
    Qe = Q[batch_idx]                                             # batched_expand
    w1a, w1b, b1 = ap["f1"]
    X1 = (jnp.dot(jnp.maximum(Qe, 0.0).astype(w1a.dtype), jnp.transpose(w1a),
                  preferred_element_type=jnp.float32)
          + jnp.dot(jnp.maximum(K, 0.0).astype(w1b.dtype), jnp.transpose(w1b),
                    preferred_element_type=jnp.float32)
          + jnp.transpose(b1))
    w2, b2 = ap["f2"]
    logits = (jnp.dot(jnp.maximum(X1, 0.0).astype(w2.dtype), jnp.transpose(w2),
                      preferred_element_type=jnp.float32) + jnp.transpose(b2))[:, 0]
    B = g.shape[0]
    smax = jax.ops.segment_max(logits, batch_idx, num_segments=B)
    e = jnp.exp(logits - smax[batch_idx])
    ssum = jax.ops.segment_sum(e, batch_idx, num_segments=B) + EPS
    return e / ssum[batch_idx]


def critic_values_ref(g, cp):
    X = g
    for w, b in cp["layers"]:
        X = jnp.maximum(_lin_ref(X, w, b), 0.0)
    wf, bf = cp["final"]
    return _lin_ref(X, wf, bf)[:, 0]


def _check_case(key, g, cand, batch_idx, ap, cp):
    probs, logp, actions, values = select_action(key, g, cand, batch_idx, ap, cp)
    jax.block_until_ready((probs, logp, actions, values))
    probs_ref = actor_probs_ref(g, cand, batch_idx, ap)
    values_ref = critic_values_ref(g, cp)
    np.testing.assert_allclose(np.asarray(probs), np.asarray(probs_ref), rtol=1e-3, atol=1e-4)
    np.testing.assert_allclose(np.asarray(values), np.asarray(values_ref), rtol=1e-3, atol=1e-4)
    B = g.shape[0]
    seg_sums = np.asarray(jax.ops.segment_sum(probs, batch_idx, num_segments=B))
    assert np.all(np.abs(seg_sums - 1.0) < 1e-2), "per-graph probs do not sum to ~1"


# ----------------------------------------- main ------------------------------------------
if __name__ == "__main__":
    input_dim = 16
    enc_nb_layers = 2
    enc_nb_hidden = 32
    enc_nb_output = 16

    root = jax.random.PRNGKey(0)
    k_ap, k_cp, k_case1, k_case2 = jax.random.split(root, 4)

    actor_params = build_actor_params(k_ap, input_dim, enc_nb_layers,
                                      enc_nb_hidden, enc_nb_output)
    critic_params = build_critic_params(k_cp, input_dim, enc_nb_layers, enc_nb_hidden)

    # case 1: small (B=2, N=8) -> single-tile fast path (one candidate kernel, no combine).
    kg, kc, ks = jax.random.split(k_case1, 3)
    g1 = jax.random.normal(kg, (2, input_dim), jnp.float32)
    cand1 = jax.random.normal(kc, (8, input_dim), jnp.float32)
    bidx1 = jnp.array([0, 0, 0, 0, 0, 1, 1, 1], dtype=jnp.int32)
    _check_case(ks, g1, cand1, bidx1, actor_params, critic_params)

    # case 2: larger (B=3, N=300) -> multi-tile path (parallel grid + combine + norm kernel).
    kg, kc, ks = jax.random.split(k_case2, 3)
    g2 = jax.random.normal(kg, (3, input_dim), jnp.float32)
    cand2 = jax.random.normal(kc, (300, input_dim), jnp.float32)
    bidx2 = jnp.asarray(np.repeat(np.arange(3), [120, 100, 80]), dtype=jnp.int32)
    _check_case(ks, g2, cand2, bidx2, actor_params, critic_params)

    print("KERNEL_OK")
</pallas_src>

<mosaic_0001>
module attributes {stable_mosaic.version = 11 : i64} {
  func.func @kernel(%arg0: memref<16x8xf32, #tpu.memory_space<vmem>>, %arg1: memref<32x16xbf16, #tpu.memory_space<vmem>>, %arg2: memref<32x1xf32, #tpu.memory_space<vmem>>, %arg3: memref<32x32xbf16, #tpu.memory_space<vmem>>, %arg4: memref<32x1xf32, #tpu.memory_space<vmem>>, %arg5: memref<16x32xbf16, #tpu.memory_space<vmem>>, %arg6: memref<16x1xf32, #tpu.memory_space<vmem>>, %arg7: memref<32x16xbf16, #tpu.memory_space<vmem>>, %arg8: memref<32x1xf32, #tpu.memory_space<vmem>>, %arg9: memref<32x32xbf16, #tpu.memory_space<vmem>>, %arg10: memref<32x1xf32, #tpu.memory_space<vmem>>, %arg11: memref<1x32xbf16, #tpu.memory_space<vmem>>, %arg12: memref<1x1xf32, #tpu.memory_space<vmem>>, %arg13: memref<16x8xbf16, #tpu.memory_space<vmem>>, %arg14: memref<1x8xf32, #tpu.memory_space<vmem>>) attributes {dimension_semantics = [], scalar_prefetch = 0 : i64, scratch_operands = 0 : i64, tpu.core_type = #tpu.core_type<tc>} {
    %c0 = arith.constant 0 : index
    %c0_0 = arith.constant 0 : index
    %0 = vector.load %arg0[%c0, %c0_0] : memref<16x8xf32, #tpu.memory_space<vmem>>, vector<16x8xf32>
    %c0_1 = arith.constant 0 : index
    %c0_2 = arith.constant 0 : index
    %1 = vector.load %arg1[%c0_1, %c0_2] : memref<32x16xbf16, #tpu.memory_space<vmem>>, vector<32x16xbf16>
    %2 = arith.truncf %0 : vector<16x8xf32> to vector<16x8xbf16>
    %cst = arith.constant dense<0.000000e+00> : vector<32x8xf32>
    %3 = tpu.matmul %1, %2, %cst {dimension_numbers = #tpu.dot_dimension_numbers<[1], [0], [0], [1], [0, 0, 1, 1], [], []>} : vector<32x16xbf16>, vector<16x8xbf16>, vector<32x8xf32> -> vector<32x8xf32>
    %c0_3 = arith.constant 0 : index
    %c0_4 = arith.constant 0 : index
    %4 = vector.load %arg2[%c0_3, %c0_4] : memref<32x1xf32, #tpu.memory_space<vmem>>, vector<32x1xf32>
    %5 = vector.broadcast %4 : vector<32x1xf32> to vector<32x8xf32>
    %6 = arith.addf %3, %5 : vector<32x8xf32>
    %cst_5 = arith.constant 0.000000e+00 : f32
    %7 = vector.broadcast %cst_5 : f32 to vector<32x8xf32>
    %8 = arith.maximumf %6, %7 : vector<32x8xf32>
    %9 = arith.truncf %8 : vector<32x8xf32> to vector<32x8xbf16>
    %c0_6 = arith.constant 0 : index
    %c0_7 = arith.constant 0 : index
    %10 = vector.load %arg3[%c0_6, %c0_7] : memref<32x32xbf16, #tpu.memory_space<vmem>>, vector<32x32xbf16>
    %cst_8 = arith.constant dense<0.000000e+00> : vector<32x8xf32>
    %11 = tpu.matmul %10, %9, %cst_8 {dimension_numbers = #tpu.dot_dimension_numbers<[1], [0], [0], [1], [0, 0, 1, 1], [], []>} : vector<32x32xbf16>, vector<32x8xbf16>, vector<32x8xf32> -> vector<32x8xf32>
    %c0_9 = arith.constant 0 : index
    %c0_10 = arith.constant 0 : index
    %12 = vector.load %arg4[%c0_9, %c0_10] : memref<32x1xf32, #tpu.memory_space<vmem>>, vector<32x1xf32>
    %13 = vector.broadcast %12 : vector<32x1xf32> to vector<32x8xf32>
    %14 = arith.addf %11, %13 : vector<32x8xf32>
    %cst_11 = arith.constant 0.000000e+00 : f32
    %15 = vector.broadcast %cst_11 : f32 to vector<32x8xf32>
    %16 = arith.maximumf %14, %15 : vector<32x8xf32>
    %17 = arith.truncf %16 : vector<32x8xf32> to vector<32x8xbf16>
    %c0_12 = arith.constant 0 : index
    %c0_13 = arith.constant 0 : index
    %18 = vector.load %arg5[%c0_12, %c0_13] : memref<16x32xbf16, #tpu.memory_space<vmem>>, vector<16x32xbf16>
    %cst_14 = arith.constant dense<0.000000e+00> : vector<16x8xf32>
    %19 = tpu.matmul %18, %17, %cst_14 {dimension_numbers = #tpu.dot_dimension_numbers<[1], [0], [0], [1], [0, 0, 1, 1], [], []>} : vector<16x32xbf16>, vector<32x8xbf16>, vector<16x8xf32> -> vector<16x8xf32>
    %c0_15 = arith.constant 0 : index
    %c0_16 = arith.constant 0 : index
    %20 = vector.load %arg6[%c0_15, %c0_16] : memref<16x1xf32, #tpu.memory_space<vmem>>, vector<16x1xf32>
    %21 = vector.broadcast %20 : vector<16x1xf32> to vector<16x8xf32>
    %22 = arith.addf %19, %21 : vector<16x8xf32>
    %23 = arith.truncf %22 : vector<16x8xf32> to vector<16x8xbf16>
    %c0_17 = arith.constant 0 : index
    %c0_18 = arith.constant 0 : index
    %24 = vector.load %arg13[%c0_17, %c0_18] : memref<16x8xbf16, #tpu.memory_space<vmem>>, vector<16x8xbf16>
    tpu.vector_store %arg13[%c0_17, %c0_18], %23 {strides = array<i32>} : memref<16x8xbf16, #tpu.memory_space<vmem>>, vector<16x8xbf16>,
    %c0_19 = arith.constant 0 : index
    %c0_20 = arith.constant 0 : index
    %25 = vector.load %arg7[%c0_19, %c0_20] : memref<32x16xbf16, #tpu.memory_space<vmem>>, vector<32x16xbf16>
    %26 = arith.truncf %0 : vector<16x8xf32> to vector<16x8xbf16>
    %cst_21 = arith.constant dense<0.000000e+00> : vector<32x8xf32>
    %27 = tpu.matmul %25, %26, %cst_21 {dimension_numbers = #tpu.dot_dimension_numbers<[1], [0], [0], [1], [0, 0, 1, 1], [], []>} : vector<32x16xbf16>, vector<16x8xbf16>, vector<32x8xf32> -> vector<32x8xf32>
    %c0_22 = arith.constant 0 : index
    %c0_23 = arith.constant 0 : index
    %28 = vector.load %arg8[%c0_22, %c0_23] : memref<32x1xf32, #tpu.memory_space<vmem>>, vector<32x1xf32>
    %29 = vector.broadcast %28 : vector<32x1xf32> to vector<32x8xf32>
    %30 = arith.addf %27, %29 : vector<32x8xf32>
    %cst_24 = arith.constant 0.000000e+00 : f32
    %31 = vector.broadcast %cst_24 : f32 to vector<32x8xf32>
    %32 = arith.maximumf %30, %31 : vector<32x8xf32>
    %33 = arith.truncf %32 : vector<32x8xf32> to vector<32x8xbf16>
    %c0_25 = arith.constant 0 : index
    %c0_26 = arith.constant 0 : index
    %34 = vector.load %arg9[%c0_25, %c0_26] : memref<32x32xbf16, #tpu.memory_space<vmem>>, vector<32x32xbf16>
    %cst_27 = arith.constant dense<0.000000e+00> : vector<32x8xf32>
    %35 = tpu.matmul %34, %33, %cst_27 {dimension_numbers = #tpu.dot_dimension_numbers<[1], [0], [0], [1], [0, 0, 1, 1], [], []>} : vector<32x32xbf16>, vector<32x8xbf16>, vector<32x8xf32> -> vector<32x8xf32>
    %c0_28 = arith.constant 0 : index
    %c0_29 = arith.constant 0 : index
    %36 = vector.load %arg10[%c0_28, %c0_29] : memref<32x1xf32, #tpu.memory_space<vmem>>, vector<32x1xf32>
    %37 = vector.broadcast %36 : vector<32x1xf32> to vector<32x8xf32>
    %38 = arith.addf %35, %37 : vector<32x8xf32>
    %cst_30 = arith.constant 0.000000e+00 : f32
    %39 = vector.broadcast %cst_30 : f32 to vector<32x8xf32>
    %40 = arith.maximumf %38, %39 : vector<32x8xf32>
    %41 = arith.truncf %40 : vector<32x8xf32> to vector<32x8xbf16>
    %c0_31 = arith.constant 0 : index
    %c0_32 = arith.constant 0 : index
    %42 = vector.load %arg11[%c0_31, %c0_32] : memref<1x32xbf16, #tpu.memory_space<vmem>>, vector<1x32xbf16>
    %cst_33 = arith.constant dense<0.000000e+00> : vector<1x8xf32>
    %43 = tpu.matmul %42, %41, %cst_33 {dimension_numbers = #tpu.dot_dimension_numbers<[1], [0], [0], [1], [0, 0, 1, 1], [], []>} : vector<1x32xbf16>, vector<32x8xbf16>, vector<1x8xf32> -> vector<1x8xf32>
    %c0_34 = arith.constant 0 : index
    %c0_35 = arith.constant 0 : index
    %44 = vector.load %arg12[%c0_34, %c0_35] : memref<1x1xf32, #tpu.memory_space<vmem>>, vector<1x1xf32>
    %45 = vector.broadcast %44 : vector<1x1xf32> to vector<1x8xf32>
    %46 = arith.addf %43, %45 : vector<1x8xf32>
    %c0_36 = arith.constant 0 : index
    %c0_37 = arith.constant 0 : index
    %47 = vector.load %arg14[%c0_36, %c0_37] : memref<1x8xf32, #tpu.memory_space<vmem>>, vector<1x8xf32>
    tpu.vector_store %arg14[%c0_36, %c0_37], %46 {strides = array<i32>} : memref<1x8xf32, #tpu.memory_space<vmem>>, vector<1x8xf32>,
    return
  }
}

</mosaic_0001>

<llo_original>
// kernel: tpu_custom_call.1
$region0: #{tpu_custom_call.1}
  #allocation0 [shape = 'u32[]', space=smem, size = 0x4, offset = 0x4, fixed_abs, tag = 'smem constant byte address 0x4 - core index']
  #allocation1 [shape = 'u32[72,128]{1,0:T(1,128)}', space=vmem, size = 0x9000, scoped, tag = 'internal scratch']
  #allocation2 [shape = 'f32[1,1]{1,0:T(1,128)S(1)}', space=vmem, size = 0x200, scoped, tag = 'scoped memory for tpu_custom_call.1']
  %s0 = inlined_call_operand.vmem [shape: f32[16,8], index: 0, kind: input, shape index: {}]
  %s1 = inlined_call_operand.vmem [shape: bf16[32,16], index: 1, kind: input, shape index: {}]
  %s2 = inlined_call_operand.vmem [shape: f32[32,1], index: 2, kind: input, shape index: {}]
  %s3 = inlined_call_operand.vmem [shape: bf16[32,32], index: 3, kind: input, shape index: {}]
  %s4 = inlined_call_operand.vmem [shape: f32[32,1], index: 4, kind: input, shape index: {}]
  %s5 = inlined_call_operand.vmem [shape: bf16[16,32], index: 5, kind: input, shape index: {}]
  %s6 = inlined_call_operand.vmem [shape: f32[16,1], index: 6, kind: input, shape index: {}]
  %s7 = inlined_call_operand.vmem [shape: bf16[32,16], index: 7, kind: input, shape index: {}]
  %s8 = inlined_call_operand.vmem [shape: f32[32,1], index: 8, kind: input, shape index: {}]
  %s9 = inlined_call_operand.vmem [shape: bf16[32,32], index: 9, kind: input, shape index: {}]
  %s10 = inlined_call_operand.vmem [shape: f32[32,1], index: 10, kind: input, shape index: {}]
  %s11 = inlined_call_operand.vmem [shape: bf16[1,32], index: 11, kind: input, shape index: {}]
  %s12 = inlined_call_operand.<no memory space> [shape: f32[1,1], index: 12, kind: input, shape index: {}]
  %s13 = inlined_call_operand.vmem [shape: bf16[16,8], index: 13, kind: output, shape index: {0}]
  %s14 = inlined_call_operand.hbm [shape: f32[1,8], index: 14, kind: output, shape index: {1}]
  %15 = xla_tuple %s13, %s14
  %s16 = sld [smem:[#allocation0]]
  $region70: #{tpu_custom_call.1} parent=0
    _
  %s18 = ssub.s32 1, %s16
  %s19 = scalar_select 0, %s18, %s16
  %v20 = vstv %s12
  %21 = vst [vmem:[#allocation2] sm:$0x1] %v20
  $region1: #{tpu_custom_call.1} parent=0
    #allocation3 [shape = 'u8[512]{0}', space=vmem, size = 0x400, scoped, tag = 'output window, operand 1, single buffered']
    #allocation4 [shape = 's32[1]{0}', space=sflag, size = 0x4, scoped, tag = 'scoped memory for tpu_custom_call.1']
    %22 = vsyncpa [#allocation4], 0
    // Predicated region
    $region2: #{tpu_custom_call.1} parent=1 // pred_check
      _
    $region3: #{tpu_custom_call.1} parent=1 // pred_check_branch
      %24 = sbr.rel (0) target = $region5
    $region4: #{tpu_custom_call.1} parent=1 // pred_region
      _
    $region5: #{tpu_custom_call.1} parent=1 // pred_fallthru
      _
    // Predicated region
    $region6: #{tpu_custom_call.1} parent=1 // pred_check
      _
    $region7: #{tpu_custom_call.1} parent=1 // pred_check_branch
      %26 = sbr.rel (0) target = $region9
    $region8: #{tpu_custom_call.1} parent=1 // pred_region
      _
    $region9: #{tpu_custom_call.1} parent=1 // pred_fallthru
      _
    // Predicated region
    $region10: #{tpu_custom_call.1} parent=1 // pred_check
      _
    $region11: #{tpu_custom_call.1} parent=1 // pred_check_branch
      %28 = sbr.rel (0) target = $region13
    $region12: #{tpu_custom_call.1} parent=1 // pred_region
      _
    $region13: #{tpu_custom_call.1} parent=1 // pred_fallthru
      _
    // Predicated region
    $region14: #{tpu_custom_call.1} parent=1 // pred_check
      _
    $region15: #{tpu_custom_call.1} parent=1 // pred_check_branch
      %30 = sbr.rel (0) target = $region17
    $region16: #{tpu_custom_call.1} parent=1 // pred_region
      _
    $region17: #{tpu_custom_call.1} parent=1 // pred_fallthru
      _
    // Predicated region
    $region18: #{tpu_custom_call.1} parent=1 // pred_check
      _
    $region19: #{tpu_custom_call.1} parent=1 // pred_check_branch
      %32 = sbr.rel (0) target = $region21
    $region20: #{tpu_custom_call.1} parent=1 // pred_region
      _
    $region21: #{tpu_custom_call.1} parent=1 // pred_fallthru
      _
    // Predicated region
    $region22: #{tpu_custom_call.1} parent=1 // pred_check
      _
    $region23: #{tpu_custom_call.1} parent=1 // pred_check_branch
      %34 = sbr.rel (0) target = $region25
    $region24: #{tpu_custom_call.1} parent=1 // pred_region
      _
    $region25: #{tpu_custom_call.1} parent=1 // pred_fallthru
      _
    // Predicated region
    $region26: #{tpu_custom_call.1} parent=1 // pred_check
      _
    $region27: #{tpu_custom_call.1} parent=1 // pred_check_branch
      %36 = sbr.rel (0) target = $region29
    $region28: #{tpu_custom_call.1} parent=1 // pred_region
      _
    $region29: #{tpu_custom_call.1} parent=1 // pred_fallthru
      _
    // Predicated region
    $region30: #{tpu_custom_call.1} parent=1 // pred_check
      _
    $region31: #{tpu_custom_call.1} parent=1 // pred_check_branch
      %38 = sbr.rel (0) target = $region33
    $region32: #{tpu_custom_call.1} parent=1 // pred_region
      _
    $region33: #{tpu_custom_call.1} parent=1 // pred_fallthru
      _
    // Predicated region
    $region34: #{tpu_custom_call.1} parent=1 // pred_check
      _
    $region35: #{tpu_custom_call.1} parent=1 // pred_check_branch
      %40 = sbr.rel (0) target = $region37
    $region36: #{tpu_custom_call.1} parent=1 // pred_region
      _
    $region37: #{tpu_custom_call.1} parent=1 // pred_fallthru
      _
    // Predicated region
    $region38: #{tpu_custom_call.1} parent=1 // pred_check
      _
    $region39: #{tpu_custom_call.1} parent=1 // pred_check_branch
      %42 = sbr.rel (0) target = $region41
    $region40: #{tpu_custom_call.1} parent=1 // pred_region
      _
    $region41: #{tpu_custom_call.1} parent=1 // pred_fallthru
      _
    // Predicated region
    $region42: #{tpu_custom_call.1} parent=1 // pred_check
      _
    $region43: #{tpu_custom_call.1} parent=1 // pred_check_branch
      %44 = sbr.rel (0) target = $region45
    $region44: #{tpu_custom_call.1} parent=1 // pred_region
      _
    $region45: #{tpu_custom_call.1} parent=1 // pred_fallthru
      _
    // Predicated region
    $region46: #{tpu_custom_call.1} parent=1 // pred_check
      _
    $region47: #{tpu_custom_call.1} parent=1 // pred_check_branch
      %46 = sbr.rel (0) target = $region49
    $region48: #{tpu_custom_call.1} parent=1 // pred_region
      _
    $region49: #{tpu_custom_call.1} parent=1 // pred_fallthru
      _
    // Predicated region
    $region50: #{tpu_custom_call.1} parent=1 // pred_check
      _
    $region51: #{tpu_custom_call.1} parent=1 // pred_check_branch
      %48 = sbr.rel (0) target = $region53
    $region52: #{tpu_custom_call.1} parent=1 // pred_region
      _
    $region53: #{tpu_custom_call.1} parent=1 // pred_fallthru
      _
    %v50 = vld [vmem:[%s0] sm:$0xff]
    %v51 = vld [vmem:[%s0 + $0x8] sm:$0xff]
    %v52 = vld [vmem:[%s1] sm:$0xf]
    %v53 = vld [vmem:[%s1 + $0x4] sm:$0xf]
    %v54 = vld [vmem:[%s1 + $0x8] sm:$0xf]
    %v55 = vld [vmem:[%s1 + $0xc] sm:$0xf]
    %v56 = vpack.c.bf16 %v51, %v50
    %v57 = vld [vmem:[%s2] sm:$0xff]
    %v58 = vld [vmem:[%s2 + $0x8] sm:$0xff]
    %v59 = vld [vmem:[%s2 + $0x10] sm:$0xff]
    %v60 = vld [vmem:[%s2 + $0x18] sm:$0xff]
    %62 = vset.pattern.permute.xlu0 0
    %63 = vperm.xlu0 %62, %v57
    %v64 = vpop.permute.xlu0 %63
    %67 = vset.pattern.permute.xlu0 0
    %68 = vperm.xlu0 %67, %v58
    %v69 = vpop.permute.xlu0 %68
    %72 = vset.pattern.permute.xlu0 0
    %73 = vperm.xlu0 %72, %v59
    %v74 = vpop.permute.xlu0 %73
    %77 = vset.pattern.permute.xlu0 0
    %78 = vperm.xlu0 %77, %v60
    %v79 = vpop.permute.xlu0 %78
    %v85 = vunpack.c.l.b16 %v52
    %v86 = vunpack.c.l.b16 %v53
    %v87 = vunpack.c.l.b16 %v54
    %v88 = vunpack.c.l.b16 %v55
    %v89 = vpack.c.b16 %v86, %v85
    %v90 = vpack.c.b16 %v88, %v87
    %vm91 = vcmask 130048
    %v93 = vsel %vm91, %v89, 0
    %v96 = vsel %vm91, %v90, 0
    %98 = vmatpush.bf16.msra.mxu0 0
    %99 = vmatpush.bf16.msra.mxu0 0
    %100 = vmatpush.bf16.msra.mxu0 0
    %101 = vmatpush.bf16.msra.mxu0 0
    %102 = vmatpush.bf16.msra.mxu0 0
    %103 = vmatpush.bf16.msra.mxu0 0
    %104 = vmatpush.bf16.msra.mxu0 0
    %105 = vmatpush.bf16.msra.mxu0 %v56
    %106 = vmatmul.bf16.gmra.mxu0 %v93
    %v107 = vpop.f32.mrf.mxu0
    %v108 = vadd.f32 %v64, %v107
    %v109 = vpop.f32.mrf.mxu0
    %v110 = vadd.f32 %v69, %v109
    %111 = vmatmul.bf16.gmra.mxu0 %v96
    %v112 = vpop.f32.mrf.mxu0
    %v113 = vadd.f32 %v74, %v112
    %v114 = vpop.f32.mrf.mxu0
    %v115 = vadd.f32 %v79, %v114
    %116 = vdwg.mxu0
    %v117 = vmax.f32 %v108, 0.0
    %v118 = vmax.f32 %v110, 0.0
    %v119 = vmax.f32 %v113, 0.0
    %v120 = vmax.f32 %v115, 0.0
    %v121 = vpack.c.bf16 %v118, %v117
    %v122 = vpack.c.bf16 %v120, %v119
    %v123 = vld [vmem:[%s3] sm:$0xf]
    %v124 = vld [vmem:[%s3 + $0x4] sm:$0xf]
    %v125 = vld [vmem:[%s3 + $0x8] sm:$0xf]
    %v126 = vld [vmem:[%s3 + $0xc] sm:$0xf]
    %v127 = vld [vmem:[%s4] sm:$0xff]
    %v128 = vld [vmem:[%s4 + $0x8] sm:$0xff]
    %v129 = vld [vmem:[%s4 + $0x10] sm:$0xff]
    %v130 = vld [vmem:[%s4 + $0x18] sm:$0xff]
    %132 = vset.pattern.permute.xlu0 0
    %133 = vperm.xlu0 %132, %v127
    %v134 = vpop.permute.xlu0 %133
    %137 = vset.pattern.permute.xlu0 0
    %138 = vperm.xlu0 %137, %v128
    %v139 = vpop.permute.xlu0 %138
    %142 = vset.pattern.permute.xlu0 0
    %143 = vperm.xlu0 %142, %v129
    %v144 = vpop.permute.xlu0 %143
    %147 = vset.pattern.permute.xlu0 0
    %148 = vperm.xlu0 %147, %v130
    %v149 = vpop.permute.xlu0 %148
    %v155 = vunpack.c.l.b16 %v123
    %v156 = vunpack.c.l.b16 %v124
    %v157 = vunpack.c.l.b16 %v125
    %v158 = vunpack.c.l.b16 %v126
    %v159 = vpack.c.b16 %v156, %v155
    %v160 = vpack.c.b16 %v158, %v157
    %vm161 = vcmask 261120
    %v163 = vsel %vm161, %v159, 0
    %v166 = vsel %vm161, %v160, 0
    %168 = vmatpush.bf16.msra.mxu0 0
    %169 = vmatpush.bf16.msra.mxu0 0
    %170 = vmatpush.bf16.msra.mxu0 0
    %171 = vmatpush.bf16.msra.mxu0 0
    %172 = vmatpush.bf16.msra.mxu0 0
    %173 = vmatpush.bf16.msra.mxu0 0
    %174 = vmatpush.bf16.msra.mxu0 %v122
    %175 = vmatpush.bf16.msra.mxu0 %v121
    %176 = vmatmul.bf16.gmra.mxu0 %v163
    %v177 = vpop.f32.mrf.mxu0
    %v178 = vadd.f32 %v134, %v177
    %v179 = vpop.f32.mrf.mxu0
    %v180 = vadd.f32 %v139, %v179
    %181 = vmatmul.bf16.gmra.mxu0 %v166
    %v182 = vpop.f32.mrf.mxu0
    %v183 = vadd.f32 %v144, %v182
    %v184 = vpop.f32.mrf.mxu0
    %v185 = vadd.f32 %v149, %v184
    %186 = vdwg.mxu0
    %v187 = vmax.f32 %v178, 0.0
    %v188 = vmax.f32 %v180, 0.0
    %v189 = vmax.f32 %v183, 0.0
    %v190 = vmax.f32 %v185, 0.0
    %v191 = vpack.c.bf16 %v188, %v187
    %v192 = vpack.c.bf16 %v190, %v189
    %v193 = vld [vmem:[%s5] sm:$0xf]
    %v194 = vld [vmem:[%s5 + $0x4] sm:$0xf]
    %v195 = vld [vmem:[%s6] sm:$0xff]
    %v196 = vld [vmem:[%s6 + $0x8] sm:$0xff]
    %198 = vset.pattern.permute.xlu0 0
    %199 = vperm.xlu0 %198, %v195
    %v200 = vpop.permute.xlu0 %199
    %203 = vset.pattern.permute.xlu0 0
    %204 = vperm.xlu0 %203, %v196
    %v205 = vpop.permute.xlu0 %204
    %v209 = vunpack.c.l.b16 %v193
    %v210 = vunpack.c.l.b16 %v194
    %v211 = vpack.c.b16 %v210, %v209
    %v213 = vsel %vm161, %v211, 0
    %215 = vmatpush.bf16.msra.mxu0 0
    %216 = vmatpush.bf16.msra.mxu0 0
    %217 = vmatpush.bf16.msra.mxu0 0
    %218 = vmatpush.bf16.msra.mxu0 0
    %219 = vmatpush.bf16.msra.mxu0 0
    %220 = vmatpush.bf16.msra.mxu0 0
    %221 = vmatpush.bf16.msra.mxu0 %v192
    %222 = vmatpush.bf16.msra.mxu0 %v191
    %223 = vmatmul.bf16.gmra.mxu0 %v213
    %v224 = vpop.f32.mrf.mxu0
    %v225 = vadd.f32 %v200, %v224
    %v226 = vpop.f32.mrf.mxu0
    %v227 = vadd.f32 %v205, %v226
    %228 = vdwg.mxu0
    %v229 = vpack.c.bf16 %v225, %v225
    %v230 = vpack.c.bf16 %v227, %v227
    %vm231 = vcmask 60416
    %232 = vst.msk [vmem:[%s13] sm:$0xf] %vm231, %v229
    %233 = vst.msk [vmem:[%s13 + $0x4] sm:$0xf] %vm231, %v230
    %v234 = vld [vmem:[%s7] sm:$0xf]
    %v235 = vld [vmem:[%s7 + $0x4] sm:$0xf]
    %v236 = vld [vmem:[%s7 + $0x8] sm:$0xf]
    %v237 = vld [vmem:[%s7 + $0xc] sm:$0xf]
    %v238 = vld [vmem:[%s8] sm:$0xff]
    %v239 = vld [vmem:[%s8 + $0x8] sm:$0xff]
    %v240 = vld [vmem:[%s8 + $0x10] sm:$0xff]
    %v241 = vld [vmem:[%s8 + $0x18] sm:$0xff]
    %243 = vset.pattern.permute.xlu0 0
    %244 = vperm.xlu0 %243, %v238
    %v245 = vpop.permute.xlu0 %244
    %248 = vset.pattern.permute.xlu0 0
    %249 = vperm.xlu0 %248, %v239
    %v250 = vpop.permute.xlu0 %249
    %253 = vset.pattern.permute.xlu0 0
    %254 = vperm.xlu0 %253, %v240
    %v255 = vpop.permute.xlu0 %254
    %258 = vset.pattern.permute.xlu0 0
    %259 = vperm.xlu0 %258, %v241
    %v260 = vpop.permute.xlu0 %259
    %v266 = vunpack.c.l.b16 %v234
    %v267 = vunpack.c.l.b16 %v235
    %v268 = vunpack.c.l.b16 %v236
    %v269 = vunpack.c.l.b16 %v237
    %v270 = vpack.c.b16 %v267, %v266
    %v271 = vpack.c.b16 %v269, %v268
    %v273 = vsel %vm91, %v270, 0
    %v276 = vsel %vm91, %v271, 0
    %278 = vmatpush.bf16.msra.mxu0 0
    %279 = vmatpush.bf16.msra.mxu0 0
    %280 = vmatpush.bf16.msra.mxu0 0
    %281 = vmatpush.bf16.msra.mxu0 0
    %282 = vmatpush.bf16.msra.mxu0 0
    %283 = vmatpush.bf16.msra.mxu0 0
    %284 = vmatpush.bf16.msra.mxu0 0
    %285 = vmatpush.bf16.msra.mxu0 %v56
    %286 = vmatmul.bf16.gmra.mxu0 %v273
    %v287 = vpop.f32.mrf.mxu0
    %v288 = vadd.f32 %v245, %v287
    %v289 = vpop.f32.mrf.mxu0
    %v290 = vadd.f32 %v250, %v289
    %291 = vmatmul.bf16.gmra.mxu0 %v276
    %v292 = vpop.f32.mrf.mxu0
    %v293 = vadd.f32 %v255, %v292
    %v294 = vpop.f32.mrf.mxu0
    %v295 = vadd.f32 %v260, %v294
    %296 = vdwg.mxu0
    %v297 = vmax.f32 %v288, 0.0
    %v298 = vmax.f32 %v290, 0.0
    %v299 = vmax.f32 %v293, 0.0
    %v300 = vmax.f32 %v295, 0.0
    %v301 = vpack.c.bf16 %v298, %v297
    %v302 = vpack.c.bf16 %v300, %v299
    %v303 = vld [vmem:[%s9] sm:$0xf]
    %v304 = vld [vmem:[%s9 + $0x4] sm:$0xf]
    %v305 = vld [vmem:[%s9 + $0x8] sm:$0xf]
    %v306 = vld [vmem:[%s9 + $0xc] sm:$0xf]
    %v307 = vld [vmem:[%s10] sm:$0xff]
    %v308 = vld [vmem:[%s10 + $0x8] sm:$0xff]
    %v309 = vld [vmem:[%s10 + $0x10] sm:$0xff]
    %v310 = vld [vmem:[%s10 + $0x18] sm:$0xff]
    %312 = vset.pattern.permute.xlu0 0
    %313 = vperm.xlu0 %312, %v307
    %v314 = vpop.permute.xlu0 %313
    %317 = vset.pattern.permute.xlu0 0
    %318 = vperm.xlu0 %317, %v308
    %v319 = vpop.permute.xlu0 %318
    %322 = vset.pattern.permute.xlu0 0
    %323 = vperm.xlu0 %322, %v309
    %v324 = vpop.permute.xlu0 %323
    %327 = vset.pattern.permute.xlu0 0
    %328 = vperm.xlu0 %327, %v310
    %v329 = vpop.permute.xlu0 %328
    %v335 = vunpack.c.l.b16 %v303
    %v336 = vunpack.c.l.b16 %v304
    %v337 = vunpack.c.l.b16 %v305
    %v338 = vunpack.c.l.b16 %v306
    %v339 = vpack.c.b16 %v336, %v335
    %v340 = vpack.c.b16 %v338, %v337
    %v342 = vsel %vm161, %v339, 0
    %v345 = vsel %vm161, %v340, 0
    %347 = vmatpush.bf16.msra.mxu0 0
    %348 = vmatpush.bf16.msra.mxu0 0
    %349 = vmatpush.bf16.msra.mxu0 0
    %350 = vmatpush.bf16.msra.mxu0 0
    %351 = vmatpush.bf16.msra.mxu0 0
    %352 = vmatpush.bf16.msra.mxu0 0
    %353 = vmatpush.bf16.msra.mxu0 %v302
    %354 = vmatpush.bf16.msra.mxu0 %v301
    %355 = vmatmul.bf16.gmra.mxu0 %v342
    %v356 = vpop.f32.mrf.mxu0
    %v357 = vadd.f32 %v314, %v356
    %v358 = vpop.f32.mrf.mxu0
    %v359 = vadd.f32 %v319, %v358
    %360 = vmatmul.bf16.gmra.mxu0 %v345
    %v361 = vpop.f32.mrf.mxu0
    %v362 = vadd.f32 %v324, %v361
    %v363 = vpop.f32.mrf.mxu0
    %v364 = vadd.f32 %v329, %v363
    %365 = vdwg.mxu0
    %v366 = vmax.f32 %v357, 0.0
    %v367 = vmax.f32 %v359, 0.0
    %v368 = vmax.f32 %v362, 0.0
    %v369 = vmax.f32 %v364, 0.0
    %v370 = vpack.c.bf16 %v367, %v366
    %v371 = vpack.c.bf16 %v369, %v368
    %v372 = vld [vmem:[%s11] sm:$0x1]
    %v373 = vld [vmem:[#allocation2] sm:$0x1]
    %375 = vset.pattern.permute.xlu0 0
    %376 = vperm.xlu0 %375, %v373
    %v377 = vpop.permute.xlu0 %376
    %v379 = vperm.slane %v377, 0
    %v381 = vsel %vm161, %v372, 0
    %383 = vmatpush.bf16.msra.mxu0 0
    %384 = vmatpush.bf16.msra.mxu0 0
    %385 = vmatpush.bf16.msra.mxu0 0
    %386 = vmatpush.bf16.msra.mxu0 0
    %387 = vmatpush.bf16.msra.mxu0 0
    %388 = vmatpush.bf16.msra.mxu0 0
    %389 = vmatpush.bf16.msra.mxu0 %v371
    %390 = vmatpush.bf16.msra.mxu0 %v370
    %391 = vmatmul.bf16.gmra.mxu0 %v381
    %v392 = vpop.f32.mrf.mxu0
    %v393 = vadd.f32 %v379, %v392
    %v394 = vpop.f32.mrf.mxu0
    %395 = vdwg.mxu0
    %vm396 = vcmask 57344
    %397 = vst.msk [vmem:[#allocation3] sm:$0x1] %vm396, %v393
    // Predicated region
    $region54: #{tpu_custom_call.1} parent=1 // pred_check
      _
    $region55: #{tpu_custom_call.1} parent=1 // pred_check_branch
      %399 = sbr.rel (0) target = $region57
    $region56: #{tpu_custom_call.1} parent=1 // pred_region
      _
    $region57: #{tpu_custom_call.1} parent=1 // pred_fallthru
      _
    // Predicated region
    $region58: #{tpu_custom_call.1} parent=1 // pred_check
      _
    $region59: #{tpu_custom_call.1} parent=1 // pred_check_branch
      %401 = sbr.rel (0) target = $region61
    $region60: #{tpu_custom_call.1} parent=1 // pred_region
      %403 = vsyncadd [#allocation4], 0
      %s405 = sshll.u32 [#allocation3], 4
      %s406 = int_to_ptr.vmem [resolvable:$true] %s405
      %s407 = sshll.u32 %s14, 4
      %s408 = int_to_ptr.hbm [resolvable:$true] %s407
      %410 = dma.vmem_to_hbm [thread:$0]  %s406, 16, %s408, [#allocation4]
    $region61: #{tpu_custom_call.1} parent=1 // pred_fallthru
      _
    // Predicated region
    $region62: #{tpu_custom_call.1} parent=1 // pred_check
      _
    $region63: #{tpu_custom_call.1} parent=1 // pred_check_branch
      %412 = sbr.rel (0) target = $region65
    $region64: #{tpu_custom_call.1} parent=1 // pred_region
      _
    $region65: #{tpu_custom_call.1} parent=1 // pred_fallthru
      _
    // Predicated region
    $region66: #{tpu_custom_call.1} parent=1 // pred_check
      _
    $region67: #{tpu_custom_call.1} parent=1 // pred_check_branch
      %414 = sbr.rel (0) target = $region69
    $region68: #{tpu_custom_call.1} parent=1 // pred_region
      %416 = dma.done [#allocation4], 16
    $region69: #{tpu_custom_call.1} parent=1 // pred_fallthru
      _
    %417 = vsyncpa [#allocation4], 1

</llo_original>
